<compile_context>
chip_gen: v5e
topology: v5e:2x2
jax: 0.10.0
libtpu: 0.0.40
codegen_flags: <defaults>
</compile_context>

<pallas_src>
import jax
import jax.numpy as jnp
from jax.experimental import pallas as pl
from jax.experimental.pallas import tpu as pltpu

INPUT_DIM = 2
NUM_RULES = 3
OUTPUT_DIM = 4
BATCH = 8


def _anfis_kernel(x_ref, ct_ref, ist_ref, wmat_ref, bias_ref,
                  preds_ref, str_ref, norm_ref):
    X = x_ref[...]                      # (T, D)
    CT = ct_ref[...]                    # (D, R)    centers, transposed
    IST = ist_ref[...]                  # (D, R)    1/sigma, transposed
    Wm = wmat_ref[...]                  # (D, R*O)  consequent weights
    B = bias_ref[...]                   # (1, R*O)  consequent biases

    T, D = X.shape
    R = CT.shape[1]
    RO = Wm.shape[1]
    O = RO // R

    # --- layers 1+2 (strengths) fused with layer-4 linear part --------------
    # Single static loop over the D features: membership z's and the K=D
    # consequent contraction are both broadcast FMAs on the VPU (no MXU).
    sumsq = jnp.zeros((T, R), jnp.float32)
    rule_out = jnp.zeros((T, RO), jnp.float32)
    for d in range(D):                  # D tiny & static -> unrolled
        xd = X[:, d:d + 1]                                       # (T, 1)
        z = (xd - CT[d:d + 1, :]) * IST[d:d + 1, :]              # (T, R)
        sumsq = sumsq + z * z
        rule_out = rule_out + xd * Wm[d:d + 1, :]                # (T, R*O)
    rule_out = rule_out + B
    strengths = jnp.exp(-0.5 * sumsq)   # (T, R): T*R transcendentals (EUP)

    # --- layer 3: normalization ---------------------------------------------
    s_sum = jnp.sum(strengths, axis=1, keepdims=True) + 1e-8     # (T, 1)
    inv = pl.reciprocal(s_sum, approx=True)   # EUP seed (otherwise-idle slot)
    inv = inv * (2.0 - s_sum * inv)           # Newton step 1  (tiny (T,1)
    inv = inv * (2.0 - s_sum * inv)           # Newton step 2   column, ~free)
    normalized = strengths * inv                                  # (T, R)

    # --- layer 5: weighted sum of rule outputs ------------------------------
    preds = jnp.zeros((T, O), jnp.float32)
    for r in range(R):                  # R tiny & static -> VPU broadcast FMAs
        preds = preds + normalized[:, r:r + 1] * rule_out[:, r * O:(r + 1) * O]

    # --- exact-width stores (no padding, no concatenate) --------------------
    preds_ref[...] = preds
    str_ref[...] = strengths
    norm_ref[...] = normalized


def anfis_forward(X, centers, sigmas, coeffs, *, tile_n=1024):
    X = jnp.asarray(X, jnp.float32)
    centers = jnp.asarray(centers, jnp.float32)
    sigmas = jnp.asarray(sigmas, jnp.float32)
    coeffs = jnp.asarray(coeffs, jnp.float32)

    N, D = X.shape
    R = centers.shape[0]
    O = coeffs.shape[-1]

    # Lane-dense, kernel-friendly parameter layouts (host-side prep).
    ct = centers.T                                                  # (D, R)
    ist = (1.0 / sigmas).T                                          # (D, R)
    wmat = jnp.transpose(coeffs[:, :D, :], (1, 0, 2)).reshape(D, R * O)
    bias = coeffs[:, D, :].reshape(1, R * O)

    # Sublane-aligned batch tiling; pad N up to a tile multiple.
    tile = max(8, min(tile_n, N))
    tile = ((tile + 7) // 8) * 8
    n_tiles = (N + tile - 1) // tile
    n_pad = n_tiles * tile
    if n_pad != N:
        X = jnp.pad(X, ((0, n_pad - N), (0, 0)))

    preds, strengths, normalized = pl.pallas_call(
        _anfis_kernel,
        out_shape=(
            jax.ShapeDtypeStruct((n_pad, O), jnp.float32),
            jax.ShapeDtypeStruct((n_pad, R), jnp.float32),
            jax.ShapeDtypeStruct((n_pad, R), jnp.float32),
        ),
        grid=(n_tiles,),
        in_specs=[
            pl.BlockSpec((tile, D), lambda i: (i, 0)),      # X: batch-tiled
            pl.BlockSpec((D, R), lambda i: (0, 0)),         # centers^T
            pl.BlockSpec((D, R), lambda i: (0, 0)),         # 1/sigma^T
            pl.BlockSpec((D, R * O), lambda i: (0, 0)),     # fused coeff mat
            pl.BlockSpec((1, R * O), lambda i: (0, 0)),     # fused bias row
        ],
        out_specs=(
            pl.BlockSpec((tile, O), lambda i: (i, 0)),
            pl.BlockSpec((tile, R), lambda i: (i, 0)),
            pl.BlockSpec((tile, R), lambda i: (i, 0)),
        ),
        compiler_params=pltpu.CompilerParams(
            dimension_semantics=("parallel",)),
    )(X, ct, ist, wmat, bias)

    return preds[:N], strengths[:N], normalized[:N]


def anfis_reference(X, centers, sigmas, coeffs):
    # Pure-JAX reference mirroring the PyTorch forward.
    z = (X[:, None, :] - centers[None, :, :]) / sigmas[None, :, :]   # (N, R, D)
    mu = jnp.exp(-0.5 * z * z)
    strengths = jnp.prod(mu, axis=2)                                  # (N, R)
    s_sum = jnp.sum(strengths, axis=1, keepdims=True)
    normalized = strengths / (s_sum + 1e-8)
    D = X.shape[1]
    preds = jnp.zeros((X.shape[0], coeffs.shape[-1]), jnp.float32)
    for r in range(coeffs.shape[0]):
        rule_out = X @ coeffs[r, :D] + coeffs[r, D]
        preds = preds + normalized[:, r:r + 1] * rule_out
    return preds, strengths, normalized


def _check(X, centers, sigmas, coeffs, **kw):
    outs = anfis_forward(X, centers, sigmas, coeffs, **kw)
    jax.block_until_ready(outs)
    refs = anfis_reference(X, centers, sigmas, coeffs)
    for got, ref in zip(outs, refs):
        assert got.shape == ref.shape
        assert jnp.allclose(got, ref, atol=1e-5, rtol=1e-5)


if __name__ == "__main__":
    key = jax.random.PRNGKey(0)
    kx, kc, ks, kw, kx2 = jax.random.split(key, 5)

    X = jax.random.normal(kx, (BATCH, INPUT_DIM), dtype=jnp.float32)
    centers = jax.random.normal(kc, (NUM_RULES, INPUT_DIM), dtype=jnp.float32)
    sigmas = 0.5 + jax.random.uniform(ks, (NUM_RULES, INPUT_DIM), dtype=jnp.float32)
    # PyTorch __init__ zeros the coeffs; use deterministic nonzero values so
    # the consequent path is actually exercised.
    coeffs = 0.1 * jax.random.normal(
        kw, (NUM_RULES, INPUT_DIM + 1, OUTPUT_DIM), dtype=jnp.float32)

    # Small demo batch (single grid step).
    _check(X, centers, sigmas, coeffs)

    # Larger, non-multiple batch: exercises padding and a multi-step
    # ("parallel") grid so both v7x TensorCores have work.
    X2 = jax.random.normal(kx2, (1037, INPUT_DIM), dtype=jnp.float32)
    _check(X2, centers, sigmas, coeffs, tile_n=256)

    print("KERNEL_OK")
</pallas_src>

<mosaic_0001>
module attributes {stable_mosaic.version = 11 : i64} {
  func.func @_anfis_kernel(%arg0: i32, %arg1: memref<8x2xf32, #tpu.memory_space<vmem>>, %arg2: memref<2x3xf32, #tpu.memory_space<vmem>>, %arg3: memref<2x3xf32, #tpu.memory_space<vmem>>, %arg4: memref<2x12xf32, #tpu.memory_space<vmem>>, %arg5: memref<1x12xf32, #tpu.memory_space<vmem>>, %arg6: memref<8x4xf32, #tpu.memory_space<vmem>>, %arg7: memref<8x3xf32, #tpu.memory_space<vmem>>, %arg8: memref<8x3xf32, #tpu.memory_space<vmem>>) attributes {dimension_semantics = [#tpu.dimension_semantics<parallel>], iteration_bounds = array<i64: 1>, scalar_prefetch = 0 : i64, scratch_operands = 0 : i64, tpu.core_type = #tpu.core_type<tc>, window_params = [{transform_indices = @transform_0, window_bounds = array<i64: 8, 2>}, {pipeline_mode = #tpu.pipeline_mode<synchronous>, transform_indices = @transform_1, window_bounds = array<i64: 2, 3>}, {pipeline_mode = #tpu.pipeline_mode<synchronous>, transform_indices = @transform_2, window_bounds = array<i64: 2, 3>}, {pipeline_mode = #tpu.pipeline_mode<synchronous>, transform_indices = @transform_3, window_bounds = array<i64: 2, 12>}, {pipeline_mode = #tpu.pipeline_mode<synchronous>, transform_indices = @transform_4, window_bounds = array<i64: 1, 12>}, {transform_indices = @transform_5, window_bounds = array<i64: 8, 4>}, {transform_indices = @transform_6, window_bounds = array<i64: 8, 3>}, {transform_indices = @transform_7, window_bounds = array<i64: 8, 3>}]} {
    %c0 = arith.constant 0 : index
    %c0_0 = arith.constant 0 : index
    %0 = vector.load %arg1[%c0, %c0_0] : memref<8x2xf32, #tpu.memory_space<vmem>>, vector<8x2xf32>
    %c0_1 = arith.constant 0 : index
    %c0_2 = arith.constant 0 : index
    %1 = vector.load %arg2[%c0_1, %c0_2] : memref<2x3xf32, #tpu.memory_space<vmem>>, vector<2x3xf32>
    %c0_3 = arith.constant 0 : index
    %c0_4 = arith.constant 0 : index
    %2 = vector.load %arg3[%c0_3, %c0_4] : memref<2x3xf32, #tpu.memory_space<vmem>>, vector<2x3xf32>
    %c0_5 = arith.constant 0 : index
    %c0_6 = arith.constant 0 : index
    %3 = vector.load %arg4[%c0_5, %c0_6] : memref<2x12xf32, #tpu.memory_space<vmem>>, vector<2x12xf32>
    %c0_7 = arith.constant 0 : index
    %c0_8 = arith.constant 0 : index
    %4 = vector.load %arg5[%c0_7, %c0_8] : memref<1x12xf32, #tpu.memory_space<vmem>>, vector<1x12xf32>
    %cst = arith.constant 0.000000e+00 : f32
    %5 = vector.broadcast %cst : f32 to vector<8x3xf32>
    %cst_9 = arith.constant 0.000000e+00 : f32
    %6 = vector.broadcast %cst_9 : f32 to vector<8x12xf32>
    %7 = vector.extract_strided_slice %0 {offsets = [0, 0], sizes = [8, 1], strides = [1, 1]} : vector<8x2xf32> to vector<8x1xf32>
    %8 = vector.extract_strided_slice %1 {offsets = [0, 0], sizes = [1, 3], strides = [1, 1]} : vector<2x3xf32> to vector<1x3xf32>
    %9 = vector.broadcast %7 : vector<8x1xf32> to vector<8x3xf32>
    %10 = vector.broadcast %8 : vector<1x3xf32> to vector<8x3xf32>
    %11 = arith.subf %9, %10 : vector<8x3xf32>
    %12 = vector.extract_strided_slice %2 {offsets = [0, 0], sizes = [1, 3], strides = [1, 1]} : vector<2x3xf32> to vector<1x3xf32>
    %13 = vector.broadcast %12 : vector<1x3xf32> to vector<8x3xf32>
    %14 = arith.mulf %11, %13 : vector<8x3xf32>
    %15 = arith.mulf %14, %14 : vector<8x3xf32>
    %16 = arith.addf %5, %15 : vector<8x3xf32>
    %17 = vector.extract_strided_slice %3 {offsets = [0, 0], sizes = [1, 12], strides = [1, 1]} : vector<2x12xf32> to vector<1x12xf32>
    %18 = vector.broadcast %7 : vector<8x1xf32> to vector<8x12xf32>
    %19 = vector.broadcast %17 : vector<1x12xf32> to vector<8x12xf32>
    %20 = arith.mulf %18, %19 : vector<8x12xf32>
    %21 = arith.addf %6, %20 : vector<8x12xf32>
    %22 = vector.extract_strided_slice %0 {offsets = [0, 1], sizes = [8, 1], strides = [1, 1]} : vector<8x2xf32> to vector<8x1xf32>
    %23 = vector.extract_strided_slice %1 {offsets = [1, 0], sizes = [1, 3], strides = [1, 1]} : vector<2x3xf32> to vector<1x3xf32>
    %24 = vector.broadcast %22 : vector<8x1xf32> to vector<8x3xf32>
    %25 = vector.broadcast %23 : vector<1x3xf32> to vector<8x3xf32>
    %26 = arith.subf %24, %25 : vector<8x3xf32>
    %27 = vector.extract_strided_slice %2 {offsets = [1, 0], sizes = [1, 3], strides = [1, 1]} : vector<2x3xf32> to vector<1x3xf32>
    %28 = vector.broadcast %27 : vector<1x3xf32> to vector<8x3xf32>
    %29 = arith.mulf %26, %28 : vector<8x3xf32>
    %30 = arith.mulf %29, %29 : vector<8x3xf32>
    %31 = arith.addf %16, %30 : vector<8x3xf32>
    %32 = vector.extract_strided_slice %3 {offsets = [1, 0], sizes = [1, 12], strides = [1, 1]} : vector<2x12xf32> to vector<1x12xf32>
    %33 = vector.broadcast %22 : vector<8x1xf32> to vector<8x12xf32>
    %34 = vector.broadcast %32 : vector<1x12xf32> to vector<8x12xf32>
    %35 = arith.mulf %33, %34 : vector<8x12xf32>
    %36 = arith.addf %21, %35 : vector<8x12xf32>
    %37 = vector.broadcast %4 : vector<1x12xf32> to vector<8x12xf32>
    %38 = arith.addf %36, %37 : vector<8x12xf32>
    %cst_10 = arith.constant -5.000000e-01 : f32
    %39 = vector.broadcast %cst_10 : f32 to vector<8x3xf32>
    %40 = arith.mulf %39, %31 : vector<8x3xf32>
    %41 = math.exp %40 : vector<8x3xf32>
    %cst_11 = arith.constant dense<0.000000e+00> : vector<8xf32>
    %42 = vector.multi_reduction <add>, %41, %cst_11 [1] : vector<8x3xf32> to vector<8xf32>
    %43 = vector.shape_cast %42 : vector<8xf32> to vector<8x1xf32>
    %cst_12 = arith.constant 9.99999993E-9 : f32
    %44 = vector.broadcast %cst_12 : f32 to vector<8x1xf32>
    %45 = arith.addf %43, %44 : vector<8x1xf32>
    %46 = tpu.reciprocal %45 {approx = true} : vector<8x1xf32> -> vector<8x1xf32>
    %47 = arith.mulf %45, %46 : vector<8x1xf32>
    %cst_13 = arith.constant 2.000000e+00 : f32
    %48 = vector.broadcast %cst_13 : f32 to vector<8x1xf32>
    %49 = arith.subf %48, %47 : vector<8x1xf32>
    %50 = arith.mulf %46, %49 : vector<8x1xf32>
    %51 = arith.mulf %45, %50 : vector<8x1xf32>
    %cst_14 = arith.constant 2.000000e+00 : f32
    %52 = vector.broadcast %cst_14 : f32 to vector<8x1xf32>
    %53 = arith.subf %52, %51 : vector<8x1xf32>
    %54 = arith.mulf %50, %53 : vector<8x1xf32>
    %55 = vector.broadcast %54 : vector<8x1xf32> to vector<8x3xf32>
    %56 = arith.mulf %41, %55 : vector<8x3xf32>
    %cst_15 = arith.constant 0.000000e+00 : f32
    %57 = vector.broadcast %cst_15 : f32 to vector<8x4xf32>
    %58 = vector.extract_strided_slice %56 {offsets = [0, 0], sizes = [8, 1], strides = [1, 1]} : vector<8x3xf32> to vector<8x1xf32>
    %59 = vector.extract_strided_slice %38 {offsets = [0, 0], sizes = [8, 4], strides = [1, 1]} : vector<8x12xf32> to vector<8x4xf32>
    %60 = vector.broadcast %58 : vector<8x1xf32> to vector<8x4xf32>
    %61 = arith.mulf %60, %59 : vector<8x4xf32>
    %62 = arith.addf %57, %61 : vector<8x4xf32>
    %63 = vector.extract_strided_slice %56 {offsets = [0, 1], sizes = [8, 1], strides = [1, 1]} : vector<8x3xf32> to vector<8x1xf32>
    %64 = vector.extract_strided_slice %38 {offsets = [0, 4], sizes = [8, 4], strides = [1, 1]} : vector<8x12xf32> to vector<8x4xf32>
    %65 = vector.broadcast %63 : vector<8x1xf32> to vector<8x4xf32>
    %66 = arith.mulf %65, %64 : vector<8x4xf32>
    %67 = arith.addf %62, %66 : vector<8x4xf32>
    %68 = vector.extract_strided_slice %56 {offsets = [0, 2], sizes = [8, 1], strides = [1, 1]} : vector<8x3xf32> to vector<8x1xf32>
    %69 = vector.extract_strided_slice %38 {offsets = [0, 8], sizes = [8, 4], strides = [1, 1]} : vector<8x12xf32> to vector<8x4xf32>
    %70 = vector.broadcast %68 : vector<8x1xf32> to vector<8x4xf32>
    %71 = arith.mulf %70, %69 : vector<8x4xf32>
    %72 = arith.addf %67, %71 : vector<8x4xf32>
    %c0_16 = arith.constant 0 : index
    %c0_17 = arith.constant 0 : index
    %73 = vector.load %arg6[%c0_16, %c0_17] : memref<8x4xf32, #tpu.memory_space<vmem>>, vector<8x4xf32>
    tpu.vector_store %arg6[%c0_16, %c0_17], %72 {strides = array<i32>} : memref<8x4xf32, #tpu.memory_space<vmem>>, vector<8x4xf32>,
    %c0_18 = arith.constant 0 : index
    %c0_19 = arith.constant 0 : index
    %74 = vector.load %arg7[%c0_18, %c0_19] : memref<8x3xf32, #tpu.memory_space<vmem>>, vector<8x3xf32>
    tpu.vector_store %arg7[%c0_18, %c0_19], %41 {strides = array<i32>} : memref<8x3xf32, #tpu.memory_space<vmem>>, vector<8x3xf32>,
    %c0_20 = arith.constant 0 : index
    %c0_21 = arith.constant 0 : index
    %75 = vector.load %arg8[%c0_20, %c0_21] : memref<8x3xf32, #tpu.memory_space<vmem>>, vector<8x3xf32>
    tpu.vector_store %arg8[%c0_20, %c0_21], %56 {strides = array<i32>} : memref<8x3xf32, #tpu.memory_space<vmem>>, vector<8x3xf32>,
    return
  }
  func.func @transform_0(%arg0: i32) -> (i32, i32) {
    %c0_i32 = arith.constant 0 : i32
    %c0_i32_0 = arith.constant 0 : i32
    return %arg0, %c0_i32 : i32, i32
  }
  func.func @transform_1(%arg0: i32) -> (i32, i32) {
    %c0_i32 = arith.constant 0 : i32
    %c0_i32_0 = arith.constant 0 : i32
    %c0_i32_1 = arith.constant 0 : i32
    return %c0_i32, %c0_i32_0 : i32, i32
  }
  func.func @transform_2(%arg0: i32) -> (i32, i32) {
    %c0_i32 = arith.constant 0 : i32
    %c0_i32_0 = arith.constant 0 : i32
    %c0_i32_1 = arith.constant 0 : i32
    return %c0_i32, %c0_i32_0 : i32, i32
  }
  func.func @transform_3(%arg0: i32) -> (i32, i32) {
    %c0_i32 = arith.constant 0 : i32
    %c0_i32_0 = arith.constant 0 : i32
    %c0_i32_1 = arith.constant 0 : i32
    return %c0_i32, %c0_i32_0 : i32, i32
  }
  func.func @transform_4(%arg0: i32) -> (i32, i32) {
    %c0_i32 = arith.constant 0 : i32
    %c0_i32_0 = arith.constant 0 : i32
    %c0_i32_1 = arith.constant 0 : i32
    return %c0_i32, %c0_i32_0 : i32, i32
  }
  func.func @transform_5(%arg0: i32) -> (i32, i32) {
    %c0_i32 = arith.constant 0 : i32
    %c0_i32_0 = arith.constant 0 : i32
    return %arg0, %c0_i32 : i32, i32
  }
  func.func @transform_6(%arg0: i32) -> (i32, i32) {
    %c0_i32 = arith.constant 0 : i32
    %c0_i32_0 = arith.constant 0 : i32
    return %arg0, %c0_i32 : i32, i32
  }
  func.func @transform_7(%arg0: i32) -> (i32, i32) {
    %c0_i32 = arith.constant 0 : i32
    %c0_i32_0 = arith.constant 0 : i32
    return %arg0, %c0_i32 : i32, i32
  }
}

</mosaic_0001>

<llo_original>
// kernel: tpu_custom_call.1
$region0: #{tpu_custom_call.1}
  #allocation0 [shape = 'u32[]', space=smem, size = 0x4, offset = 0x4, fixed_abs, tag = 'smem constant byte address 0x4 - core index']
  #allocation1 [shape = 'u32[72,128]{1,0:T(1,128)}', space=vmem, size = 0x9000, scoped, tag = 'internal scratch']
  %s0 = inlined_call_operand.vmem [shape: f32[8,2], index: 0, kind: input, shape index: {}]
  %s1 = inlined_call_operand.vmem [shape: f32[2,3], index: 1, kind: input, shape index: {}]
  %s2 = inlined_call_operand.vmem [shape: f32[2,3], index: 2, kind: input, shape index: {}]
  %s3 = inlined_call_operand.vmem [shape: f32[2,12], index: 3, kind: input, shape index: {}]
  %s4 = inlined_call_operand.vmem [shape: f32[1,12], index: 4, kind: input, shape index: {}]
  %s5 = inlined_call_operand.vmem [shape: f32[8,4], index: 5, kind: output, shape index: {0}]
  %s6 = inlined_call_operand.vmem [shape: f32[8,3], index: 6, kind: output, shape index: {1}]
  %s7 = inlined_call_operand.vmem [shape: f32[8,3], index: 7, kind: output, shape index: {2}]
  %8 = xla_tuple %s5, %s6, %s7
  %s9 = sld [smem:[#allocation0]]
  $region46: #{tpu_custom_call.1} parent=0
    _
  %s11 = ssub.s32 1, %s9
  %s12 = scalar_select 0, %s11, %s9
  // Predicated region
  $region2: #{tpu_custom_call.1} parent=0 // pred_check
    _
  $region3: #{tpu_custom_call.1} parent=0 // pred_check_branch
    %14 = sbr.rel (0) target = $region5
  $region4: #{tpu_custom_call.1} parent=0 // pred_region
    _
  $region5: #{tpu_custom_call.1} parent=0 // pred_fallthru
    _
  // Predicated region
  $region6: #{tpu_custom_call.1} parent=0 // pred_check
    _
  $region7: #{tpu_custom_call.1} parent=0 // pred_check_branch
    %16 = sbr.rel (0) target = $region9
  $region8: #{tpu_custom_call.1} parent=0 // pred_region
    _
  $region9: #{tpu_custom_call.1} parent=0 // pred_fallthru
    _
  // Predicated region
  $region10: #{tpu_custom_call.1} parent=0 // pred_check
    _
  $region11: #{tpu_custom_call.1} parent=0 // pred_check_branch
    %18 = sbr.rel (0) target = $region13
  $region12: #{tpu_custom_call.1} parent=0 // pred_region
    _
  $region13: #{tpu_custom_call.1} parent=0 // pred_fallthru
    _
  // Predicated region
  $region14: #{tpu_custom_call.1} parent=0 // pred_check
    _
  $region15: #{tpu_custom_call.1} parent=0 // pred_check_branch
    %20 = sbr.rel (0) target = $region17
  $region16: #{tpu_custom_call.1} parent=0 // pred_region
    _
  $region17: #{tpu_custom_call.1} parent=0 // pred_fallthru
    _
  // Predicated region
  $region18: #{tpu_custom_call.1} parent=0 // pred_check
    _
  $region19: #{tpu_custom_call.1} parent=0 // pred_check_branch
    %22 = sbr.rel (0) target = $region21
  $region20: #{tpu_custom_call.1} parent=0 // pred_region
    _
  $region21: #{tpu_custom_call.1} parent=0 // pred_fallthru
    _
  %v23 = vld [vmem:[%s0] sm:$0xff]
  %v24 = vld [vmem:[%s1] sm:$0x3]
  %v25 = vld [vmem:[%s2] sm:$0x3]
  %v26 = vld [vmem:[%s3] sm:$0x3]
  %v27 = vld [vmem:[%s4] sm:$0x1]
  %29 = vset.pattern.permute.xlu0 0
  %30 = vperm.xlu0 %29, %v23
  %v31 = vpop.permute.xlu0 %30
  %v33 = vperm.slane %v24, 0
  %v34 = vsub.f32 %v31, %v33
  %v35 = vperm.slane %v25, 0
  %v36 = vmul.f32 %v34, %v35
  %v37 = vmul.f32 %v36, %v36
  %v38 = vadd.f32 %v37, 0.0
  %v39 = vperm.slane %v26, 0
  %v40 = vmul.f32 %v31, %v39
  %v41 = vadd.f32 %v40, 0.0
  %42 = vset.pattern.permute.xlu0 1
  %43 = vperm.xlu0 %42, %v23
  %v44 = vpop.permute.xlu0 %43
  %v46 = vperm.slane %v24, 1
  %v47 = vsub.f32 %v44, %v46
  %v48 = vperm.slane %v25, 1
  %v49 = vmul.f32 %v47, %v48
  %v50 = vmul.f32 %v49, %v49
  %v51 = vadd.f32 %v38, %v50
  %v52 = vperm.slane %v26, 1
  %v53 = vmul.f32 %v44, %v52
  %v54 = vadd.f32 %v41, %v53
  %v56 = vperm.slane %v27, 0
  %v58 = vadd.f32 %v54, %v56
  %v59 = vmul.f32 %v51, -0.5
  %v60 = vmul.f32 %v59, 1.442695
  %v61 = vpow.pop %v60
  %vm62 = vcmask 23552
  %v63 = vsel %vm62, %v61, 0.0
  %64 = vadd.xlane.f32.xlu0 %v63
  %v65 = vpop.xlane.xlu0 %64
  %v66 = vadd.f32 %v65, 1e-08
  %v67 = vrcp.pop %v66
  %v68 = vmul.f32 %v66, %v67
  %v69 = vsub.f32 2.0, %v68
  %v70 = vmul.f32 %v67, %v69
  %v71 = vmul.f32 %v66, %v70
  %v72 = vsub.f32 2.0, %v71
  %v73 = vmul.f32 %v70, %v72
  %v74 = vmul.f32 %v61, %v73
  %76 = vset.pattern.permute.xlu0 0
  %77 = vperm.xlu0 %76, %v74
  %v78 = vpop.permute.xlu0 %77
  %v80 = vmul.f32 %v78, %v58
  %v81 = vadd.f32 %v80, 0.0
  %82 = vset.pattern.permute.xlu0 1
  %83 = vperm.xlu0 %82, %v74
  %v84 = vpop.permute.xlu0 %83
  %v86 = vmul.f32 %v84, %v58
  %88 = vrot.lane.b32.xlu0 %v86, 124
  %v89 = vpop.permute.xlu0 %88
  %v91 = vadd.f32 %v81, %v89
  %92 = vset.pattern.permute.xlu0 2
  %93 = vperm.xlu0 %92, %v74
  %v94 = vpop.permute.xlu0 %93
  %v96 = vmul.f32 %v94, %v58
  %98 = vrot.lane.b32.xlu0 %v96, 120
  %v99 = vpop.permute.xlu0 %98
  %v101 = vadd.f32 %v91, %v99
  %vm102 = vcmask 31744
  %103 = vst.msk [vmem:[%s5] sm:$0xff] %vm102, %v101
  %104 = vst.msk [vmem:[%s6] sm:$0xff] %vm62, %v61
  %105 = vst.msk [vmem:[%s7] sm:$0xff] %vm62, %v74
  // Predicated region
  $region22: #{tpu_custom_call.1} parent=0 // pred_check
    _
  $region23: #{tpu_custom_call.1} parent=0 // pred_check_branch
    %107 = sbr.rel (0) target = $region25
  $region24: #{tpu_custom_call.1} parent=0 // pred_region
    _
  $region25: #{tpu_custom_call.1} parent=0 // pred_fallthru
    _
  // Predicated region
  $region26: #{tpu_custom_call.1} parent=0 // pred_check
    _
  $region27: #{tpu_custom_call.1} parent=0 // pred_check_branch
    %109 = sbr.rel (0) target = $region29
  $region28: #{tpu_custom_call.1} parent=0 // pred_region
    _
  $region29: #{tpu_custom_call.1} parent=0 // pred_fallthru
    _
  // Predicated region
  $region30: #{tpu_custom_call.1} parent=0 // pred_check
    _
  $region31: #{tpu_custom_call.1} parent=0 // pred_check_branch
    %111 = sbr.rel (0) target = $region33
  $region32: #{tpu_custom_call.1} parent=0 // pred_region
    _
  $region33: #{tpu_custom_call.1} parent=0 // pred_fallthru
    _
  // Predicated region
  $region34: #{tpu_custom_call.1} parent=0 // pred_check
    _
  $region35: #{tpu_custom_call.1} parent=0 // pred_check_branch
    %113 = sbr.rel (0) target = $region37
  $region36: #{tpu_custom_call.1} parent=0 // pred_region
    _
  $region37: #{tpu_custom_call.1} parent=0 // pred_fallthru
    _
  // Predicated region
  $region38: #{tpu_custom_call.1} parent=0 // pred_check
    _
  $region39: #{tpu_custom_call.1} parent=0 // pred_check_branch
    %115 = sbr.rel (0) target = $region41
  $region40: #{tpu_custom_call.1} parent=0 // pred_region
    _
  $region41: #{tpu_custom_call.1} parent=0 // pred_fallthru
    _
  // Predicated region
  $region42: #{tpu_custom_call.1} parent=0 // pred_check
    _
  $region43: #{tpu_custom_call.1} parent=0 // pred_check_branch
    %117 = sbr.rel (0) target = $region45
  $region44: #{tpu_custom_call.1} parent=0 // pred_region
    _
  $region45: #{tpu_custom_call.1} parent=0 // pred_fallthru
    _

</llo_original>
